<compile_context>
chip_gen: v7x
topology: tpu7x:2x2x1
jax: 0.10.0
libtpu: 0.0.40
codegen_flags: <defaults>
</compile_context>

<pallas_src>
import functools

import jax
import jax.numpy as jnp
from jax.experimental import pallas as pl
from jax.experimental.pallas import tpu as pltpu


def _tv_kernel(x_ref, out_ref, *, n_planes, width, mask_tail):
    # x_ref: (P, L) block of flattened planes.  out_ref: (1, 2, L) f32 partials.
    P, L = x_ref.shape
    W = width

    x = x_ref[...].astype(jnp.float32)

    if mask_tail:
        # Zero the planes of the cdiv tail block that lie past N*C; their diffs
        # then contribute exactly zero.  A select (jnp.where) is NaN/Inf-safe
        # against whatever stale bits the padded DMA leaves in the buffer.
        plane = pl.program_id(0) * P + jax.lax.broadcasted_iota(
            jnp.int32, (P, 1), 0)
        x = jnp.where(plane < n_planes, x, 0.0)

    # Vertical neighbours: flattened offset +W.  Every j < (H-1)*W is valid.
    dh = x[:, W:] - x[:, : L - W]                          # (P, L - W)

    # Horizontal neighbours: flattened offset +1.  Positions whose column is
    # W-1 pair with the next row and must be masked out.
    dw = x[:, 1:] - x[:, : L - 1]                          # (P, L - 1)
    col = jax.lax.broadcasted_iota(jnp.int32, (1, L - 1), 1) % W
    dw = jnp.where(col != W - 1, dw, 0.0)

    # Reduce over the plane (sublane) axis only; keep the lane axis so the
    # output stays lane-dense.  The tiny cross-lane reduce happens in JAX.
    h_lane = jnp.sum(dh * dh, axis=0, keepdims=True)       # (1, L - W)
    w_lane = jnp.sum(dw * dw, axis=0, keepdims=True)       # (1, L - 1)

    out_ref[...] = jnp.zeros(out_ref.shape, jnp.float32)   # zero the pad lanes
    out_ref[0, 0:1, : L - W] = h_lane
    out_ref[0, 1:2, : L - 1] = w_lane


def _round_up(value, multiple):
    return (value + multiple - 1) // multiple * multiple


def _cdiv(a, b):
    return (a + b - 1) // b


def _vmem_limit_bytes():
    """Scoped-VMEM limit from the chip's real capacity (64 MiB on v7x,
    128 MiB on v5e/v6e), leaving headroom for the compiler."""
    try:
        capacity = pltpu.get_tpu_info().vmem_capacity_bytes
    except Exception:
        capacity = 64 * 1024 * 1024        # safest assumption (v7x-sized)
    return max(32 * 1024 * 1024, min(capacity * 3 // 4, 100 * 1024 * 1024))


def _choose_plane_block(n_planes, length, itemsize, vmem_limit,
                        target_blocks=8, min_block_in_bytes=512 * 1024):
    """Pick P = planes per grid step using PADDED footprints.

    Lanes round up to 128 and the in-kernel f32 working copies are counted,
    not just the logical h*w*itemsize bytes.
    """
    lanes = _round_up(length, 128)
    sublane = max(8, 32 // itemsize)               # sublane tile of input dtype
    plane_in_bytes = lanes * itemsize
    # Live VMEM per plane of a block: double-buffered input + ~4 f32-sized
    # temporaries (cast copy, dh/dh^2, dw/dw^2, slack for slice relayouts).
    per_plane_vmem = lanes * (2 * itemsize + 4 * 4)
    budget = int(vmem_limit * 0.6)
    p_vmem = max(1, budget // per_plane_vmem)
    # Prefer >= target_blocks grid steps (megacore + pipelining) but keep each
    # block above a size floor so per-step grid overhead stays amortized.
    p_for_blocks = _cdiv(n_planes, target_blocks)
    p_floor = max(1, min_block_in_bytes // plane_in_bytes)
    p = min(n_planes, p_vmem, max(p_for_blocks, p_floor))
    if p < n_planes:
        p = max(sublane, (p // sublane) * sublane)  # (8,128) block constraint
    if p >= n_planes:
        p = n_planes
    return p, _cdiv(n_planes, p)


def tv_loss(x, tv_weight=1.0, plane_block=None):
    """Pallas TPU implementation of TVLoss.forward for NCHW input x."""
    B, C, H, W = x.shape
    if H < 2 or W < 2:
        raise ValueError("TVLoss requires H >= 2 and W >= 2.")
    n_planes = B * C
    L = H * W
    count_h = C * (H - 1) * W     # numel of x[:, :, 1:, :] per batch element
    count_w = C * H * (W - 1)     # numel of x[:, :, :, 1:] per batch element

    x_flat = x.reshape(n_planes, L)          # free view: planes x flat pixels
    itemsize = x_flat.dtype.itemsize
    vmem_limit = _vmem_limit_bytes()

    if plane_block is None:
        P, num_blocks = _choose_plane_block(n_planes, L, itemsize, vmem_limit)
    else:                                     # testing hook: force a block size
        P = max(1, min(plane_block, n_planes))
        if P < n_planes:
            P = min(n_planes, _round_up(P, max(8, 32 // itemsize)))
        num_blocks = _cdiv(n_planes, P)

    mask_tail = (num_blocks * P) != n_planes
    kernel = functools.partial(_tv_kernel, n_planes=n_planes, width=W,
                               mask_tail=mask_tail)

    parts = pl.pallas_call(
        kernel,
        out_shape=jax.ShapeDtypeStruct((num_blocks, 2, L), jnp.float32),
        grid_spec=pltpu.PrefetchScalarGridSpec(
            num_scalar_prefetch=0,
            grid=(num_blocks,),
            in_specs=[pl.BlockSpec((P, L), lambda i: (i, 0))],
            out_specs=pl.BlockSpec((1, 2, L), lambda i: (i, 0, 0)),
        ),
        compiler_params=pltpu.CompilerParams(
            dimension_semantics=("parallel",),
            vmem_limit_bytes=vmem_limit,
        ),
    )(x_flat)

    # Tiny final reduction + normalization (matches the PyTorch module).
    h_tv = jnp.sum(parts[:, 0, :])
    w_tv = jnp.sum(parts[:, 1, :])
    return tv_weight * 2.0 * (h_tv / count_h + w_tv / count_w) / B


def tv_loss_ref(x, tv_weight=1.0):
    """Pure-JAX reference mirroring the PyTorch module."""
    B, C, H, W = x.shape
    xf = x.astype(jnp.float32)
    count_h = C * (H - 1) * W
    count_w = C * H * (W - 1)
    h_tv = jnp.sum((xf[:, :, 1:, :] - xf[:, :, :-1, :]) ** 2)
    w_tv = jnp.sum((xf[:, :, :, 1:] - xf[:, :, :, :-1]) ** 2)
    return tv_weight * 2.0 * (h_tv / count_h + w_tv / count_w) / B


if __name__ == "__main__":
    key = jax.random.PRNGKey(0)
    k1, k2, k3 = jax.random.split(key, 3)

    # Primary small NCHW input consistent with the module's forward.
    x1 = jax.random.normal(k1, (2, 4, 16, 16), dtype=jnp.float32)
    out1 = jax.block_until_ready(tv_loss(x1, tv_weight=1.0))
    ref1 = tv_loss_ref(x1, tv_weight=1.0)
    assert jnp.allclose(out1, ref1, rtol=1e-4, atol=1e-5), (out1, ref1)

    # Non-square spatial dims; H*W (=960) is not a multiple of 128.
    x2 = jax.random.normal(k2, (2, 3, 24, 40), dtype=jnp.float32)
    out2 = jax.block_until_ready(tv_loss(x2, tv_weight=0.5))
    ref2 = tv_loss_ref(x2, tv_weight=0.5)
    assert jnp.allclose(out2, ref2, rtol=1e-4, atol=1e-5), (out2, ref2)

    # Multi-block grid with a cdiv tail (20 planes, blocks of 8 -> masked tail).
    x3 = jax.random.normal(k3, (2, 10, 16, 24), dtype=jnp.float32)
    out3 = jax.block_until_ready(tv_loss(x3, tv_weight=2.0, plane_block=8))
    ref3 = tv_loss_ref(x3, tv_weight=2.0)
    assert jnp.allclose(out3, ref3, rtol=1e-4, atol=1e-5), (out3, ref3)

    print("KERNEL_OK")
</pallas_src>

<mosaic_0001>
module attributes {stable_mosaic.version = 11 : i64} {
  func.func @_tv_kernel(%arg0: i32, %arg1: memref<8x256xf32, #tpu.memory_space<vmem>>, %arg2: memref<1x2x256xf32, #tpu.memory_space<vmem>>) attributes {dimension_semantics = [#tpu.dimension_semantics<parallel>], iteration_bounds = array<i64: 1>, scalar_prefetch = 0 : i64, scratch_operands = 0 : i64, tpu.core_type = #tpu.core_type<tc>, window_params = [{transform_indices = @transform_0, window_bounds = array<i64: 8, 256>}, {transform_indices = @transform_1, window_bounds = array<i64: 1, 2, 256>}]} {
    %c0 = arith.constant 0 : index
    %c0_0 = arith.constant 0 : index
    %0 = vector.load %arg1[%c0, %c0_0] : memref<8x256xf32, #tpu.memory_space<vmem>>, vector<8x256xf32>
    %1 = vector.extract_strided_slice %0 {offsets = [0, 16], sizes = [8, 240], strides = [1, 1]} : vector<8x256xf32> to vector<8x240xf32>
    %2 = vector.extract_strided_slice %0 {offsets = [0, 0], sizes = [8, 240], strides = [1, 1]} : vector<8x256xf32> to vector<8x240xf32>
    %3 = arith.subf %1, %2 : vector<8x240xf32>
    %4 = vector.extract_strided_slice %0 {offsets = [0, 1], sizes = [8, 255], strides = [1, 1]} : vector<8x256xf32> to vector<8x255xf32>
    %5 = vector.extract_strided_slice %0 {offsets = [0, 0], sizes = [8, 255], strides = [1, 1]} : vector<8x256xf32> to vector<8x255xf32>
    %6 = arith.subf %4, %5 : vector<8x255xf32>
    %7 = tpu.iota {dimensions = array<i32: 1>} : vector<1x255xi32>
    %c16_i32 = arith.constant 16 : i32
    %c0_i32 = arith.constant 0 : i32
    %8 = arith.cmpi eq, %c16_i32, %c0_i32 : i32
    %c1_i32 = arith.constant 1 : i32
    %9 = arith.select %8, %c1_i32, %c16_i32 : i32
    %10 = vector.broadcast %9 : i32 to vector<1x255xi32>
    %11 = arith.remsi %7, %10 : vector<1x255xi32>
    %c0_i32_1 = arith.constant 0 : i32
    %12 = vector.broadcast %c0_i32_1 : i32 to vector<1x255xi32>
    %13 = arith.cmpi ne, %11, %12 : vector<1x255xi32>
    %c0_i32_2 = arith.constant 0 : i32
    %14 = vector.broadcast %c0_i32_2 : i32 to vector<1x255xi32>
    %15 = arith.cmpi slt, %11, %14 : vector<1x255xi32>
    %c0_i32_3 = arith.constant 0 : i32
    %16 = arith.cmpi slt, %9, %c0_i32_3 : i32
    %17 = vector.broadcast %16 : i1 to vector<1x255xi1>
    %18 = vector.broadcast %17 : vector<1x255xi1> to vector<1x255xi1>
    %19 = arith.xori %15, %18 : vector<1x255xi1>
    %20 = arith.andi %19, %13 : vector<1x255xi1>
    %21 = vector.broadcast %9 : i32 to vector<1x255xi32>
    %22 = arith.addi %11, %21 : vector<1x255xi32>
    %23 = arith.select %20, %22, %11 : vector<1x255xi1>, vector<1x255xi32>
    %c15_i32 = arith.constant 15 : i32
    %24 = vector.broadcast %c15_i32 : i32 to vector<1x255xi32>
    %25 = arith.cmpi ne, %23, %24 : vector<1x255xi32>
    %cst = arith.constant 0.000000e+00 : f32
    %26 = vector.shape_cast %25 : vector<1x255xi1> to vector<1x255xi1>
    %27 = vector.broadcast %26 : vector<1x255xi1> to vector<8x255xi1>
    %28 = vector.broadcast %cst : f32 to vector<8x255xf32>
    %29 = arith.select %27, %6, %28 : vector<8x255xi1>, vector<8x255xf32>
    %30 = arith.mulf %3, %3 : vector<8x240xf32>
    %cst_4 = arith.constant dense<0.000000e+00> : vector<240xf32>
    %31 = vector.multi_reduction <add>, %30, %cst_4 [0] : vector<8x240xf32> to vector<240xf32>
    %32 = vector.shape_cast %31 : vector<240xf32> to vector<1x240xf32>
    %33 = arith.mulf %29, %29 : vector<8x255xf32>
    %cst_5 = arith.constant dense<0.000000e+00> : vector<255xf32>
    %34 = vector.multi_reduction <add>, %33, %cst_5 [0] : vector<8x255xf32> to vector<255xf32>
    %35 = vector.shape_cast %34 : vector<255xf32> to vector<1x255xf32>
    %cst_6 = arith.constant 0.000000e+00 : f32
    %36 = vector.broadcast %cst_6 : f32 to vector<1x2x256xf32>
    %c0_7 = arith.constant 0 : index
    %c0_8 = arith.constant 0 : index
    %c0_9 = arith.constant 0 : index
    %37 = vector.load %arg2[%c0_7, %c0_8, %c0_9] : memref<1x2x256xf32, #tpu.memory_space<vmem>>, vector<1x2x256xf32>
    tpu.vector_store %arg2[%c0_7, %c0_8, %c0_9], %36 {strides = array<i32>} : memref<1x2x256xf32, #tpu.memory_space<vmem>>, vector<1x2x256xf32>,
    %c0_10 = arith.constant 0 : index
    %c0_11 = arith.constant 0 : index
    %c0_12 = arith.constant 0 : index
    %38 = vector.load %arg2[%c0_10, %c0_11, %c0_12] : memref<1x2x256xf32, #tpu.memory_space<vmem>>, vector<1x1x240xf32>
    %39 = vector.shape_cast %38 : vector<1x1x240xf32> to vector<1x240xf32>
    %40 = vector.shape_cast %32 : vector<1x240xf32> to vector<1x1x240xf32>
    tpu.vector_store %arg2[%c0_10, %c0_11, %c0_12], %40 {strides = array<i32>} : memref<1x2x256xf32, #tpu.memory_space<vmem>>, vector<1x1x240xf32>,
    %c0_13 = arith.constant 0 : index
    %c1 = arith.constant 1 : index
    %c0_14 = arith.constant 0 : index
    %41 = vector.load %arg2[%c0_13, %c1, %c0_14] : memref<1x2x256xf32, #tpu.memory_space<vmem>>, vector<1x1x255xf32>
    %42 = vector.shape_cast %41 : vector<1x1x255xf32> to vector<1x255xf32>
    %43 = vector.shape_cast %35 : vector<1x255xf32> to vector<1x1x255xf32>
    tpu.vector_store %arg2[%c0_13, %c1, %c0_14], %43 {strides = array<i32>} : memref<1x2x256xf32, #tpu.memory_space<vmem>>, vector<1x1x255xf32>,
    return
  }
  func.func @transform_0(%arg0: i32) -> (i32, i32) {
    %c0_i32 = arith.constant 0 : i32
    %c0_i32_0 = arith.constant 0 : i32
    return %arg0, %c0_i32 : i32, i32
  }
  func.func @transform_1(%arg0: i32) -> (i32, i32, i32) {
    %c0_i32 = arith.constant 0 : i32
    %c0_i32_0 = arith.constant 0 : i32
    %c0_i32_1 = arith.constant 0 : i32
    return %arg0, %c0_i32, %c0_i32_0 : i32, i32, i32
  }
}

</mosaic_0001>

<llo_original>
// kernel: tpu_custom_call.1
$region0: #{tpu_custom_call.1}
  #allocation0 [shape = 'u32[]', space=smem, size = 0x4, offset = 0x4, fixed_abs, tag = 'smem constant byte address 0x4 - core index']
  #allocation1 [shape = 'u32[144,128]{1,0:T(1,128)}', space=vmem, size = 0x12000, scoped, tag = 'internal scratch']
  %s0 = inlined_call_operand.hbm [shape: f32[8,256], index: 0, kind: input, shape index: {}]
  %s1 = inlined_call_operand.hbm [shape: f32[1,2,256], index: 1, kind: output, shape index: {}]
  %s2 = sld [smem:[#allocation0]]
  $region18: #{tpu_custom_call.1} parent=0
    _
  %s4 = ssub.s32 1, %s2
  %s5 = scalar_select 0, %s4, %s2
  $region1: #{tpu_custom_call.1} parent=0
    #allocation2 [shape = 'u8[8192]{0}', space=vmem, size = 0x2000, scoped, tag = 'input window, operand 0, single buffered']
    #allocation3 [shape = 's32[1]{0}', space=sflag, size = 0x4, scoped, tag = 'scoped memory for tpu_custom_call.1']
    #allocation4 [shape = 's32[1]{0}', space=sflag, size = 0x4, scoped, tag = 'scoped memory for tpu_custom_call.1']
    #allocation5 [shape = 'u8[2048]{0}', space=vmem, size = 0x800, scoped, tag = 'output window, operand 0, single buffered']
    %6 = vsyncpa [#allocation3], 0
    %7 = vsyncpa [#allocation4], 0
    // Predicated region
    $region2: #{tpu_custom_call.1} parent=1 // pred_check
      _
    $region3: #{tpu_custom_call.1} parent=1 // pred_check_branch
      %9 = sbr.rel (0) target = $region5
    $region4: #{tpu_custom_call.1} parent=1 // pred_region
      %s11 = ssub.s32 256, 256
      %12 = vsyncadd [#allocation3], %s11
      %s14 = sshll.u32 [#allocation2], 4
      %s15 = int_to_ptr.vmem [resolvable:$true] %s14
      %17 = dma.hbm_to_vmem [thread:$0]  %s0, 256, %s15, [#allocation3]
    $region5: #{tpu_custom_call.1} parent=1 // pred_fallthru
      _
    // Predicated region
    $region6: #{tpu_custom_call.1} parent=1 // pred_check
      _
    $region7: #{tpu_custom_call.1} parent=1 // pred_check_branch
      %19 = sbr.rel (0) target = $region9
    $region8: #{tpu_custom_call.1} parent=1 // pred_region
      %20 = dma.done [#allocation3], 256
    $region9: #{tpu_custom_call.1} parent=1 // pred_fallthru
      _
    %v21 = vld [vmem:[#allocation2] sm:$0xff]
    %v22 = vld [vmem:[#allocation2 + $0x8] sm:$0xff]
    %25 = vrot.lane.b32.xlu0 %v21, 16
    %v26 = vpop.permute.xlu0 %25
    %27 = vrot.lane.b32.xlu0 %v22, 16
    %v28 = vpop.permute.xlu0 %27
    %vm29 = vcmask 130048
    %v30 = vsel %vm29, %v26, %v28
    %v33 = vsub.f32 %v21, %v26
    %v34 = vsub.f32 %v22, %v30
    %35 = vrot.lane.b32.xlu0 %v21, 1
    %v36 = vpop.permute.xlu0 %35
    %37 = vrot.lane.b32.xlu0 %v22, 1
    %v38 = vpop.permute.xlu0 %37
    %vm39 = vcmask 7168
    %v40 = vsel %vm39, %v36, %v38
    %v43 = vsub.f32 %v21, %v36
    %v44 = vsub.f32 %v22, %v40
    %v45 = vlaneseq
    %v46 = vand.u32 %v45, 127
    %v47 = vadd.s32 %v46, 128
    %vm48 = vcmp.lt.s32.totalorder %v46, 0
    %v49 = vsub.s32 0, %v46
    %v50 = vsel %vm48, %v49, %v46
    %v51 = vshrl.u32 %v50, 4
    %v52 = vand.u32 %v50, 15
    %v53 = vsub.s32 0, %v52
    %v54 = vsel %vm48, %v53, %v52
    %vm55 = vcmp.lt.s32.totalorder %v47, 0
    %v56 = vsub.s32 0, %v47
    %v57 = vsel %vm55, %v56, %v47
    %v58 = vshrl.u32 %v57, 4
    %v59 = vand.u32 %v57, 15
    %v60 = vsub.s32 0, %v59
    %v61 = vsel %vm55, %v60, %v59
    %vm62 = vcmp.ne.s32.totalorder %v54, 0
    %vm63 = vcmp.ne.s32.totalorder %v61, 0
    %vm64 = vcmp.lt.s32.totalorder %v54, 0
    %vm65 = vcmp.lt.s32.totalorder %v61, 0
    %vm66 = vmand %vm64, %vm62
    %vm67 = vmand %vm65, %vm63
    %v68 = vadd.s32 %v54, 16
    %v69 = vadd.s32 %v61, 16
    %v70 = vsel %vm66, %v68, %v54
    %v71 = vsel %vm67, %v69, %v61
    %vm72 = vcmp.ne.s32.totalorder %v70, 15
    %vm73 = vcmp.ne.s32.totalorder %v71, 15
    %v74 = vsel %vm72, 1, 0
    %v75 = vsel %vm73, 1, 0
    %vm76 = vcmp.eq.s32.totalorder %v74, 1
    %vm77 = vcmp.eq.s32.totalorder %v75, 1
    %80 = vrot.lane.b32.xlu0 %v43, 127
    %v81 = vpop.permute.xlu0 %80
    %82 = vrot.lane.b32.xlu0 %v44, 127
    %v83 = vpop.permute.xlu0 %82
    %vm84 = vcmask 1039360
    %v85 = vsel %vm84, %v81, %v83
    %v88 = vsel %vm76, %v85, 0.0
    %v89 = vsel %vm77, %v83, 0.0
    %v90 = vmul.f32 %v33, %v33
    %v91 = vmul.f32 %v34, %v34
    %vm92 = vcmask 1047680
    %v93 = vsel %vm92, %v90, 0.0
    %v94 = vrot.slane %v93, 4
    %v95 = vadd.f32 %v93, %v94
    %v96 = vrot.slane %v95, 2
    %v97 = vadd.f32 %v95, %v96
    %v98 = vrot.slane %v97, 1
    %v99 = vadd.f32 %v97, %v98
    %v100 = vrot.slane %v91, 4
    %v101 = vadd.f32 %v91, %v100
    %v102 = vrot.slane %v101, 2
    %v103 = vadd.f32 %v101, %v102
    %v104 = vrot.slane %v103, 1
    %v105 = vadd.f32 %v103, %v104
    %v106 = vmul.f32 %v88, %v88
    %v107 = vmul.f32 %v89, %v89
    %v108 = vrot.slane %v106, 4
    %v109 = vadd.f32 %v106, %v108
    %v110 = vrot.slane %v109, 2
    %v111 = vadd.f32 %v109, %v110
    %v112 = vrot.slane %v111, 1
    %v113 = vadd.f32 %v111, %v112
    %v114 = vsel %vm84, %v107, 0.0
    %v115 = vrot.slane %v114, 4
    %v116 = vadd.f32 %v114, %v115
    %v117 = vrot.slane %v116, 2
    %v118 = vadd.f32 %v116, %v117
    %v119 = vrot.slane %v118, 1
    %v120 = vadd.f32 %v118, %v119
    %121 = vst [vmem:[#allocation5] sm:$0xf] 0.0
    %v124 = vcombine.low %v99, %v105
    %v126 = vunpack.c.l.s4 1966171168
    %v127 = vunpack.c.0.s8 %v126
    %v128 = vlaneseq
    %v129 = vshrl.u32 %v128, 7
    %v130 = vsub.s32 %v127, %v129
    %v131 = vrot.slane %v124, %v130
    %v133 = vunpack.c.l.s4 1966171168
    %v134 = vunpack.c.0.s8 %v133
    %v135 = vlaneseq
    %v136 = vshrl.u32 %v135, 7
    %v137 = vsub.s32 %v134, %v136
    %v138 = vrot.slane %v131, %v137
    %139 = vrot.lane.b32.xlu0 %v138, 112
    %v140 = vpop.permute.xlu0 %139
    %v141 = vrot.slane %v140, 1
    %vm142 = vcmask 916480
    %v143 = vsel %vm142, %v140, %v141
    %v145 = vlaneseq
    %vm146 = vcmp.ge.s32.totalorder %v145, 0
    %vm147 = vcmp.lt.s32.totalorder %v145, 240
    %vm148 = vmand %vm146, %vm147
    %149 = vst.msk [vmem:[#allocation5] ss:$2 sm:$0x3] %vm148, %v143
    %v152 = vcombine.low %v113, %v120
    %v154 = vunpack.c.l.s4 1966171168
    %v155 = vunpack.c.0.s8 %v154
    %v156 = vlaneseq
    %v157 = vshrl.u32 %v156, 7
    %v158 = vsub.s32 %v155, %v157
    %v159 = vrot.slane %v152, %v158
    %v161 = vunpack.c.l.s4 1966171168
    %v162 = vunpack.c.0.s8 %v161
    %v163 = vlaneseq
    %v164 = vshrl.u32 %v163, 7
    %v165 = vsub.s32 %v162, %v164
    %v166 = vrot.slane %v159, %v165
    %vm168 = vcmp.lt.s32.totalorder %v145, 255
    %vm169 = vmand %vm146, %vm168
    %s170 = scalar_lea.vmem [#allocation5], 1
    %171 = vst.msk [vmem:[%s170] ss:$2 sm:$0x3] %vm169, %v166
    // Predicated region
    $region10: #{tpu_custom_call.1} parent=1 // pred_check
      _
    $region11: #{tpu_custom_call.1} parent=1 // pred_check_branch
      %173 = sbr.rel (0) target = $region13
    $region12: #{tpu_custom_call.1} parent=1 // pred_region
      %s175 = ssub.s32 64, 64
      %176 = vsyncadd [#allocation4], %s175
      %s178 = sshll.u32 [#allocation5], 4
      %s179 = int_to_ptr.vmem [resolvable:$true] %s178
      %181 = dma.vmem_to_hbm [thread:$0]  %s179, 64, %s1, [#allocation4]
    $region13: #{tpu_custom_call.1} parent=1 // pred_fallthru
      _
    // Predicated region
    $region14: #{tpu_custom_call.1} parent=1 // pred_check
      _
    $region15: #{tpu_custom_call.1} parent=1 // pred_check_branch
      %183 = sbr.rel (0) target = $region17
    $region16: #{tpu_custom_call.1} parent=1 // pred_region
      %184 = dma.done [#allocation4], 64
    $region17: #{tpu_custom_call.1} parent=1 // pred_fallthru
      _
    %185 = vsyncpa [#allocation3], 1
    %186 = vsyncpa [#allocation4], 1

</llo_original>
